<compile_context>
chip_gen: v6e
topology: v6e:2x2x1
jax: 0.10.0
libtpu: 0.0.40
codegen_flags: <defaults>
</compile_context>

<pallas_src>
import functools

import jax
import jax.numpy as jnp
from jax.experimental import pallas as pl
from jax.experimental.pallas import tpu as pltpu


def _round_up(n, m):
    return ((n + m - 1) // m) * m


def _cdiv(a, b):
    return (a + b - 1) // b


# --------------------------------------------------------------------------- #
# Kernel
# --------------------------------------------------------------------------- #
def _make_kernel(has_noise, compute_dtype):
    def kernel(*refs):
        if has_noise:
            (x_ref, noise_ref, we1_ref, be1_ref, we2_ref, be2_ref,
             wd1_ref, bd1_ref, wd2_ref, bd2_ref, xhat_ref, encz_ref) = refs
        else:
            (x_ref, we1_ref, be1_ref, we2_ref, be2_ref,
             wd1_ref, bd1_ref, wd2_ref, bd2_ref, xhat_ref, encz_ref) = refs
            noise_ref = None

        x = x_ref[...]

        # ---- Encoder: Linear -> ReLU -> Linear (MXU, f32 accumulate) ----
        h = jnp.dot(x, we1_ref[...],
                    preferred_element_type=jnp.float32) + be1_ref[...]
        h = jnp.maximum(h, 0.0)
        z = jnp.dot(h.astype(compute_dtype), we2_ref[...],
                    preferred_element_type=jnp.float32) + be2_ref[...]

        # ---- Gaussian encoding noise (precomputed, streamed in) ----
        if noise_ref is not None:
            z = z + noise_ref[...]

        encz_ref[...] = z.astype(encz_ref.dtype)

        # ---- Decoder: Linear -> ReLU -> Linear ----
        g = jnp.dot(z.astype(compute_dtype), wd1_ref[...],
                    preferred_element_type=jnp.float32) + bd1_ref[...]
        g = jnp.maximum(g, 0.0)
        x_hat = jnp.dot(g.astype(compute_dtype), wd2_ref[...],
                        preferred_element_type=jnp.float32) + bd2_ref[...]
        xhat_ref[...] = x_hat.astype(xhat_ref.dtype)

    return kernel


# --------------------------------------------------------------------------- #
# One-time parameter preparation (pad to lane-dense dims, cast to compute dtype)
# --------------------------------------------------------------------------- #
def prepare_params(params, compute_dtype=jnp.bfloat16):
    """Pad/cast weights once (hoisted out of the per-call path).

    Returns (padded_params, (in_dim, hidden, latent)).
    """
    we1, be1, we2, be2, wd1, bd1, wd2, bd2 = params
    IN, H = we1.shape
    Z = we2.shape[1]
    INp, Hp, Zp = _round_up(IN, 128), _round_up(H, 128), _round_up(Z, 128)

    def pad2(a, rows, cols, dtype):
        a = jnp.asarray(a, dtype)
        return jnp.pad(a, ((0, rows - a.shape[0]), (0, cols - a.shape[1])))

    padded = (
        pad2(we1, INp, Hp, compute_dtype),
        pad2(be1, 1, Hp, jnp.float32),
        pad2(we2, Hp, Zp, compute_dtype),
        pad2(be2, 1, Zp, jnp.float32),
        pad2(wd1, Zp, Hp, compute_dtype),
        pad2(bd1, 1, Hp, jnp.float32),
        pad2(wd2, Hp, INp, compute_dtype),
        pad2(bd2, 1, INp, jnp.float32),
    )
    return padded, (IN, H, Z)


def _resident_spec(rows, cols):
    """Constant-index (VMEM-resident) BlockSpec, single-buffered if supported."""
    try:
        return pl.BlockSpec((rows, cols), lambda i: (0, 0),
                            pipeline_mode=pl.Buffered(1))
    except (TypeError, ValueError):
        return pl.BlockSpec((rows, cols), lambda i: (0, 0))


# --------------------------------------------------------------------------- #
# Forward
# --------------------------------------------------------------------------- #
@functools.partial(
    jax.jit,
    static_argnames=("n_std", "latent_dim", "compute_dtype", "batch_tile",
                     "out_dtype"))
def mlp_ae_forward(x, padded_params, noise_key, *, n_std, latent_dim,
                   compute_dtype=jnp.bfloat16, batch_tile=512, out_dtype=None):
    """MLP_AE_model forward. Returns (x_hat, enc_z)."""
    B, IN = x.shape
    we1_p, be1_p, we2_p, be2_p, wd1_p, bd1_p, wd2_p, bd2_p = padded_params
    INp, Hp = we1_p.shape
    Zp = we2_p.shape[1]
    Z = latent_dim
    out_dtype = x.dtype if out_dtype is None else out_dtype
    has_noise = float(n_std) > 0.0

    wbytes = jnp.dtype(compute_dtype).itemsize
    obytes = jnp.dtype(out_dtype).itemsize
    sub = {1: 32, 2: 16, 4: 8}.get(wbytes, 8)      # sublane packing of dtype

    # --- VMEM budget (generation-aware when a TPU is visible) ---
    try:
        cap = int(0.85 * pltpu.get_tpu_info().vmem_capacity_bytes)
    except Exception:
        cap = 56 * 1024 * 1024      # conservative: fits v7x's 64 MiB physical VMEM

    def vmem_estimate(tb):
        weights = (INp * Hp + Hp * Zp + Zp * Hp + Hp * INp) * wbytes  # Buffered(1)
        biases = (2 * Hp + Zp + INp) * 4
        io = 2 * tb * (INp * wbytes + INp * obytes + Zp * obytes
                       + (Zp * 4 if has_noise else 0))
        work = tb * (2 * Hp + 2 * Zp + INp) * 4
        return weights + biases + io + work

    # --- batch tile: large, sublane-aligned, shrunk to fit VMEM ---
    TB = max(sub, _round_up(min(batch_tile, _round_up(B, sub)), sub))
    while TB > sub and vmem_estimate(TB) > cap:
        TB = max(sub, _round_up(TB // 2, sub))

    # >= 2 grid steps so v7x's second TensorCore gets work.
    num_steps = max(2, _cdiv(B, TB))
    BP = num_steps * TB

    vmem_limit = int(min(cap, max(32 * 1024 * 1024,
                                  int(1.5 * vmem_estimate(TB)) + (4 << 20))))

    # --- per-call data movement: only x (and noise) are padded here ---
    x_p = jnp.pad(x.astype(compute_dtype), ((0, BP - B), (0, INp - IN)))

    inputs = [x_p]
    in_specs = [pl.BlockSpec((TB, INp), lambda i: (i, 0))]

    if has_noise:
        noise = jax.random.normal(noise_key, (B, Z), jnp.float32) * float(n_std)
        noise_p = jnp.pad(noise, ((0, BP - B), (0, Zp - Z)))
        inputs.append(noise_p)
        in_specs.append(pl.BlockSpec((TB, Zp), lambda i: (i, 0)))

    inputs += [we1_p, be1_p, we2_p, be2_p, wd1_p, bd1_p, wd2_p, bd2_p]
    in_specs += [
        _resident_spec(INp, Hp), _resident_spec(1, Hp),
        _resident_spec(Hp, Zp), _resident_spec(1, Zp),
        _resident_spec(Zp, Hp), _resident_spec(1, Hp),
        _resident_spec(Hp, INp), _resident_spec(1, INp),
    ]

    x_hat_p, enc_z_p = pl.pallas_call(
        _make_kernel(has_noise, compute_dtype),
        grid=(num_steps,),
        in_specs=in_specs,
        out_specs=(
            pl.BlockSpec((TB, INp), lambda i: (i, 0)),
            pl.BlockSpec((TB, Zp), lambda i: (i, 0)),
        ),
        out_shape=(
            jax.ShapeDtypeStruct((BP, INp), out_dtype),
            jax.ShapeDtypeStruct((BP, Zp), out_dtype),
        ),
        compiler_params=pltpu.CompilerParams(
            dimension_semantics=("parallel",),
            vmem_limit_bytes=vmem_limit,
        ),
    )(*inputs)

    return x_hat_p[:B, :IN], enc_z_p[:B, :Z]


# --------------------------------------------------------------------------- #
# Parameter init (PyTorch nn.Linear-style, stored pre-transposed: y = x @ W + b)
# --------------------------------------------------------------------------- #
def init_params(key, in_dim, hidden, latent):
    ks = jax.random.split(key, 8)

    def lin(kw, kb, fan_in, fan_out):
        bound = 1.0 / jnp.sqrt(fan_in)
        w = jax.random.uniform(kw, (fan_in, fan_out), jnp.float32, -bound, bound)
        b = jax.random.uniform(kb, (1, fan_out), jnp.float32, -bound, bound)
        return w, b

    we1, be1 = lin(ks[0], ks[1], in_dim, hidden)
    we2, be2 = lin(ks[2], ks[3], hidden, latent)
    wd1, bd1 = lin(ks[4], ks[5], latent, hidden)
    wd2, bd2 = lin(ks[6], ks[7], hidden, in_dim)
    return (we1, be1, we2, be2, wd1, bd1, wd2, bd2)


if __name__ == "__main__":
    key = jax.random.PRNGKey(0)
    k_x, k_p, k_n = jax.random.split(key, 3)

    # Small, forward-consistent shapes (in -> hidden -> latent -> hidden -> in).
    B, IN, H, Z = 8, 32, 64, 8
    ENC_NOISE_STD = 0.1

    x = jax.random.normal(k_x, (B, IN), dtype=jnp.float32)
    params = init_params(k_p, IN, H, Z)
    we1, be1, we2, be2, wd1, bd1, wd2, bd2 = params

    # Pure-JAX reference
    enc_ref = jnp.maximum(x @ we1 + be1, 0.0) @ we2 + be2
    dec_ref = jnp.maximum(enc_ref @ wd1 + bd1, 0.0) @ wd2 + bd2

    # --- check 1: noise off, f32 compute path ---
    prep_f32, _dims = prepare_params(params, compute_dtype=jnp.float32)
    x_hat0, enc_z0 = mlp_ae_forward(x, prep_f32, k_n, n_std=0.0, latent_dim=Z,
                                    compute_dtype=jnp.float32)
    assert x_hat0.shape == (B, IN) and enc_z0.shape == (B, Z)
    assert jnp.allclose(enc_z0, enc_ref, atol=1e-2, rtol=1e-2)
    assert jnp.allclose(x_hat0, dec_ref, atol=1e-2, rtol=1e-2)

    # --- check 2: noise off, default bf16 compute + bf16 outputs ---
    prep_bf16, _dims = prepare_params(params, compute_dtype=jnp.bfloat16)
    x_hat_b, enc_z_b = mlp_ae_forward(x, prep_bf16, k_n, n_std=0.0, latent_dim=Z,
                                      out_dtype=jnp.bfloat16)
    assert jnp.allclose(enc_z_b.astype(jnp.float32), enc_ref, atol=0.1, rtol=0.1)
    assert jnp.allclose(x_hat_b.astype(jnp.float32), dec_ref, atol=0.1, rtol=0.1)

    # --- check 3: full forward with Gaussian encoding noise ---
    x_hat, enc_z = mlp_ae_forward(x, prep_bf16, k_n, n_std=ENC_NOISE_STD,
                                  latent_dim=Z)
    jax.block_until_ready((x_hat, enc_z))

    noise_ref = jax.random.normal(k_n, (B, Z), jnp.float32) * ENC_NOISE_STD
    enc_noisy_ref = enc_ref + noise_ref
    dec_noisy_ref = jnp.maximum(enc_noisy_ref @ wd1 + bd1, 0.0) @ wd2 + bd2

    assert x_hat.shape == (B, IN) and enc_z.shape == (B, Z)
    assert bool(jnp.all(jnp.isfinite(x_hat))) and bool(jnp.all(jnp.isfinite(enc_z)))
    assert jnp.allclose(enc_z, enc_noisy_ref, atol=0.1, rtol=0.1)
    assert jnp.allclose(x_hat, dec_noisy_ref, atol=0.15, rtol=0.15)

    print("KERNEL_OK")
</pallas_src>

<mosaic_0001>
module attributes {stable_mosaic.version = 11 : i64} {
  func.func @kernel(%arg0: i32, %arg1: memref<8x128xf32, #tpu.memory_space<vmem>>, %arg2: memref<128x128xf32, #tpu.memory_space<vmem>>, %arg3: memref<1x128xf32, #tpu.memory_space<vmem>>, %arg4: memref<128x128xf32, #tpu.memory_space<vmem>>, %arg5: memref<1x128xf32, #tpu.memory_space<vmem>>, %arg6: memref<128x128xf32, #tpu.memory_space<vmem>>, %arg7: memref<1x128xf32, #tpu.memory_space<vmem>>, %arg8: memref<128x128xf32, #tpu.memory_space<vmem>>, %arg9: memref<1x128xf32, #tpu.memory_space<vmem>>, %arg10: memref<8x128xf32, #tpu.memory_space<vmem>>, %arg11: memref<8x128xf32, #tpu.memory_space<vmem>>) attributes {dimension_semantics = [#tpu.dimension_semantics<parallel>], iteration_bounds = array<i64: 2>, scalar_prefetch = 0 : i64, scratch_operands = 0 : i64, tpu.core_type = #tpu.core_type<tc>, window_params = [{transform_indices = @transform_0, window_bounds = array<i64: 8, 128>}, {pipeline_mode = #tpu.pipeline_mode<synchronous>, transform_indices = @transform_1, window_bounds = array<i64: 128, 128>}, {pipeline_mode = #tpu.pipeline_mode<synchronous>, transform_indices = @transform_2, window_bounds = array<i64: 1, 128>}, {pipeline_mode = #tpu.pipeline_mode<synchronous>, transform_indices = @transform_3, window_bounds = array<i64: 128, 128>}, {pipeline_mode = #tpu.pipeline_mode<synchronous>, transform_indices = @transform_4, window_bounds = array<i64: 1, 128>}, {pipeline_mode = #tpu.pipeline_mode<synchronous>, transform_indices = @transform_5, window_bounds = array<i64: 128, 128>}, {pipeline_mode = #tpu.pipeline_mode<synchronous>, transform_indices = @transform_6, window_bounds = array<i64: 1, 128>}, {pipeline_mode = #tpu.pipeline_mode<synchronous>, transform_indices = @transform_7, window_bounds = array<i64: 128, 128>}, {pipeline_mode = #tpu.pipeline_mode<synchronous>, transform_indices = @transform_8, window_bounds = array<i64: 1, 128>}, {transform_indices = @transform_9, window_bounds = array<i64: 8, 128>}, {transform_indices = @transform_10, window_bounds = array<i64: 8, 128>}]} {
    %c0 = arith.constant 0 : index
    %c0_0 = arith.constant 0 : index
    %0 = vector.load %arg1[%c0, %c0_0] : memref<8x128xf32, #tpu.memory_space<vmem>>, vector<8x128xf32>
    %c0_1 = arith.constant 0 : index
    %c0_2 = arith.constant 0 : index
    %1 = vector.load %arg2[%c0_1, %c0_2] : memref<128x128xf32, #tpu.memory_space<vmem>>, vector<128x128xf32>
    %cst = arith.constant dense<0.000000e+00> : vector<8x128xf32>
    %2 = tpu.matmul %0, %1, %cst {dimension_numbers = #tpu.dot_dimension_numbers<[1], [0], [0], [1], [0, 0, 1, 1], [], []>} : vector<8x128xf32>, vector<128x128xf32>, vector<8x128xf32> -> vector<8x128xf32>
    %c0_3 = arith.constant 0 : index
    %c0_4 = arith.constant 0 : index
    %3 = vector.load %arg3[%c0_3, %c0_4] : memref<1x128xf32, #tpu.memory_space<vmem>>, vector<1x128xf32>
    %4 = vector.broadcast %3 : vector<1x128xf32> to vector<8x128xf32>
    %5 = arith.addf %2, %4 : vector<8x128xf32>
    %cst_5 = arith.constant 0.000000e+00 : f32
    %6 = vector.broadcast %cst_5 : f32 to vector<8x128xf32>
    %7 = arith.maximumf %5, %6 : vector<8x128xf32>
    %c0_6 = arith.constant 0 : index
    %c0_7 = arith.constant 0 : index
    %8 = vector.load %arg4[%c0_6, %c0_7] : memref<128x128xf32, #tpu.memory_space<vmem>>, vector<128x128xf32>
    %cst_8 = arith.constant dense<0.000000e+00> : vector<8x128xf32>
    %9 = tpu.matmul %7, %8, %cst_8 {dimension_numbers = #tpu.dot_dimension_numbers<[1], [0], [0], [1], [0, 0, 1, 1], [], []>} : vector<8x128xf32>, vector<128x128xf32>, vector<8x128xf32> -> vector<8x128xf32>
    %c0_9 = arith.constant 0 : index
    %c0_10 = arith.constant 0 : index
    %10 = vector.load %arg5[%c0_9, %c0_10] : memref<1x128xf32, #tpu.memory_space<vmem>>, vector<1x128xf32>
    %11 = vector.broadcast %10 : vector<1x128xf32> to vector<8x128xf32>
    %12 = arith.addf %9, %11 : vector<8x128xf32>
    %c0_11 = arith.constant 0 : index
    %c0_12 = arith.constant 0 : index
    %13 = vector.load %arg11[%c0_11, %c0_12] : memref<8x128xf32, #tpu.memory_space<vmem>>, vector<8x128xf32>
    tpu.vector_store %arg11[%c0_11, %c0_12], %12 {strides = array<i32>} : memref<8x128xf32, #tpu.memory_space<vmem>>, vector<8x128xf32>,
    %c0_13 = arith.constant 0 : index
    %c0_14 = arith.constant 0 : index
    %14 = vector.load %arg6[%c0_13, %c0_14] : memref<128x128xf32, #tpu.memory_space<vmem>>, vector<128x128xf32>
    %cst_15 = arith.constant dense<0.000000e+00> : vector<8x128xf32>
    %15 = tpu.matmul %12, %14, %cst_15 {dimension_numbers = #tpu.dot_dimension_numbers<[1], [0], [0], [1], [0, 0, 1, 1], [], []>} : vector<8x128xf32>, vector<128x128xf32>, vector<8x128xf32> -> vector<8x128xf32>
    %c0_16 = arith.constant 0 : index
    %c0_17 = arith.constant 0 : index
    %16 = vector.load %arg7[%c0_16, %c0_17] : memref<1x128xf32, #tpu.memory_space<vmem>>, vector<1x128xf32>
    %17 = vector.broadcast %16 : vector<1x128xf32> to vector<8x128xf32>
    %18 = arith.addf %15, %17 : vector<8x128xf32>
    %cst_18 = arith.constant 0.000000e+00 : f32
    %19 = vector.broadcast %cst_18 : f32 to vector<8x128xf32>
    %20 = arith.maximumf %18, %19 : vector<8x128xf32>
    %c0_19 = arith.constant 0 : index
    %c0_20 = arith.constant 0 : index
    %21 = vector.load %arg8[%c0_19, %c0_20] : memref<128x128xf32, #tpu.memory_space<vmem>>, vector<128x128xf32>
    %cst_21 = arith.constant dense<0.000000e+00> : vector<8x128xf32>
    %22 = tpu.matmul %20, %21, %cst_21 {dimension_numbers = #tpu.dot_dimension_numbers<[1], [0], [0], [1], [0, 0, 1, 1], [], []>} : vector<8x128xf32>, vector<128x128xf32>, vector<8x128xf32> -> vector<8x128xf32>
    %c0_22 = arith.constant 0 : index
    %c0_23 = arith.constant 0 : index
    %23 = vector.load %arg9[%c0_22, %c0_23] : memref<1x128xf32, #tpu.memory_space<vmem>>, vector<1x128xf32>
    %24 = vector.broadcast %23 : vector<1x128xf32> to vector<8x128xf32>
    %25 = arith.addf %22, %24 : vector<8x128xf32>
    %c0_24 = arith.constant 0 : index
    %c0_25 = arith.constant 0 : index
    %26 = vector.load %arg10[%c0_24, %c0_25] : memref<8x128xf32, #tpu.memory_space<vmem>>, vector<8x128xf32>
    tpu.vector_store %arg10[%c0_24, %c0_25], %25 {strides = array<i32>} : memref<8x128xf32, #tpu.memory_space<vmem>>, vector<8x128xf32>,
    return
  }
  func.func @transform_0(%arg0: i32) -> (i32, i32) {
    %c0_i32 = arith.constant 0 : i32
    %c0_i32_0 = arith.constant 0 : i32
    return %arg0, %c0_i32 : i32, i32
  }
  func.func @transform_1(%arg0: i32) -> (i32, i32) {
    %c0_i32 = arith.constant 0 : i32
    %c0_i32_0 = arith.constant 0 : i32
    %c0_i32_1 = arith.constant 0 : i32
    return %c0_i32, %c0_i32_0 : i32, i32
  }
  func.func @transform_2(%arg0: i32) -> (i32, i32) {
    %c0_i32 = arith.constant 0 : i32
    %c0_i32_0 = arith.constant 0 : i32
    %c0_i32_1 = arith.constant 0 : i32
    return %c0_i32, %c0_i32_0 : i32, i32
  }
  func.func @transform_3(%arg0: i32) -> (i32, i32) {
    %c0_i32 = arith.constant 0 : i32
    %c0_i32_0 = arith.constant 0 : i32
    %c0_i32_1 = arith.constant 0 : i32
    return %c0_i32, %c0_i32_0 : i32, i32
  }
  func.func @transform_4(%arg0: i32) -> (i32, i32) {
    %c0_i32 = arith.constant 0 : i32
    %c0_i32_0 = arith.constant 0 : i32
    %c0_i32_1 = arith.constant 0 : i32
    return %c0_i32, %c0_i32_0 : i32, i32
  }
  func.func @transform_5(%arg0: i32) -> (i32, i32) {
    %c0_i32 = arith.constant 0 : i32
    %c0_i32_0 = arith.constant 0 : i32
    %c0_i32_1 = arith.constant 0 : i32
    return %c0_i32, %c0_i32_0 : i32, i32
  }
  func.func @transform_6(%arg0: i32) -> (i32, i32) {
    %c0_i32 = arith.constant 0 : i32
    %c0_i32_0 = arith.constant 0 : i32
    %c0_i32_1 = arith.constant 0 : i32
    return %c0_i32, %c0_i32_0 : i32, i32
  }
  func.func @transform_7(%arg0: i32) -> (i32, i32) {
    %c0_i32 = arith.constant 0 : i32
    %c0_i32_0 = arith.constant 0 : i32
    %c0_i32_1 = arith.constant 0 : i32
    return %c0_i32, %c0_i32_0 : i32, i32
  }
  func.func @transform_8(%arg0: i32) -> (i32, i32) {
    %c0_i32 = arith.constant 0 : i32
    %c0_i32_0 = arith.constant 0 : i32
    %c0_i32_1 = arith.constant 0 : i32
    return %c0_i32, %c0_i32_0 : i32, i32
  }
  func.func @transform_9(%arg0: i32) -> (i32, i32) {
    %c0_i32 = arith.constant 0 : i32
    %c0_i32_0 = arith.constant 0 : i32
    return %arg0, %c0_i32 : i32, i32
  }
  func.func @transform_10(%arg0: i32) -> (i32, i32) {
    %c0_i32 = arith.constant 0 : i32
    %c0_i32_0 = arith.constant 0 : i32
    return %arg0, %c0_i32 : i32, i32
  }
}

</mosaic_0001>

<llo_original>
// kernel: mlp_ae_forward.1
$region0: #{mlp_ae_forward.1}
  #allocation0 [shape = 'u32[]', space=smem, size = 0x4, offset = 0x4, fixed_abs, tag = 'smem constant byte address 0x4 - core index']
  #allocation1 [shape = 'u32[144,128]{1,0:T(1,128)}', space=vmem, size = 0x12000, scoped, tag = 'internal scratch']
  %s0 = inlined_call_operand.vmem [shape: f32[16,128], index: 0, kind: input, shape index: {}]
  %s1 = inlined_call_operand.hbm [shape: f32[128,128], index: 1, kind: input, shape index: {}]
  %s2 = inlined_call_operand.vmem [shape: f32[1,128], index: 2, kind: input, shape index: {}]
  %s3 = inlined_call_operand.hbm [shape: f32[128,128], index: 3, kind: input, shape index: {}]
  %s4 = inlined_call_operand.vmem [shape: f32[1,128], index: 4, kind: input, shape index: {}]
  %s5 = inlined_call_operand.hbm [shape: f32[128,128], index: 5, kind: input, shape index: {}]
  %s6 = inlined_call_operand.vmem [shape: f32[1,128], index: 6, kind: input, shape index: {}]
  %s7 = inlined_call_operand.hbm [shape: f32[128,128], index: 7, kind: input, shape index: {}]
  %s8 = inlined_call_operand.vmem [shape: f32[1,128], index: 8, kind: input, shape index: {}]
  %s9 = inlined_call_operand.vmem [shape: f32[16,128], index: 9, kind: output, shape index: {0}]
  %s10 = inlined_call_operand.vmem [shape: f32[16,128], index: 10, kind: output, shape index: {1}]
  %11 = xla_tuple %s9, %s10
  %s12 = sld [smem:[#allocation0]]
  $region93: #{mlp_ae_forward.1} parent=0
    _
  %s14 = ssub.s32 1, %s12
  %s15 = scalar_select 0, %s14, %s12
  $region1: #{mlp_ae_forward.1} parent=0
    #allocation2 [shape = 'u8[65536]{0}', space=vmem, size = 0x10000, scoped, tag = 'input window, operand 1, single buffered']
    #allocation3 [shape = 's32[2]{0}', space=sflag, size = 0x8, scoped, tag = 'scoped memory for mlp_ae_forward.1']
    #allocation4 [shape = 'u8[65536]{0}', space=vmem, size = 0x10000, scoped, tag = 'input window, operand 3, single buffered']
    #allocation5 [shape = 's32[1]{0}', space=sflag, size = 0x4, scoped, tag = 'scoped memory for mlp_ae_forward.1']
    #allocation6 [shape = 'u8[65536]{0}', space=vmem, size = 0x10000, scoped, tag = 'input window, operand 5, single buffered']
    #allocation7 [shape = 'u8[65536]{0}', space=vmem, size = 0x10000, scoped, tag = 'input window, operand 7, single buffered']
    #allocation8 [shape = 's32[1]{0}', space=sflag, size = 0x4, scoped, tag = 'scoped memory for mlp_ae_forward.1']
    %16 = vsyncpa [#allocation3], 0
    %17 = vsyncpa [#allocation5], 0
    %18 = vsyncpa [#allocation8], 0
    loop: start=0, step=1, limit=4
    $region2: #{mlp_ae_forward.1} parent=1 // loop_pre_header
      _
    $region3: #{mlp_ae_forward.1} parent=1 // loop_header
      %s20 = sphi 0, %s24
      %p21 = scmp.ge.s32.totalorder %s20, 4
      %s30 = sphi 0, %s32
      %s33 = sphi 0, %s30
      %s34 = sphi 0, %s33
      %s50 = sphi 0, %s34
      %s54 = sphi 0, %s54
      %s56 = sphi 0, %s54
      %s57 = sphi 0, %s56
      %s71 = sphi 0, %s57
      %s75 = sphi 0, %s75
      %s77 = sphi 0, %s75
      %s78 = sphi 0, %s77
      %s92 = sphi 0, %s78
      %s96 = sphi 0, %s96
      %s98 = sphi 0, %s96
      %s99 = sphi 0, %s98
      %s113 = sphi 0, %s99
      %s117 = sphi 0, %s117
      %s119 = sphi 0, %s117
      %s120 = sphi 0, %s119
      %s134 = sphi 0, %s120
      %s138 = sphi 0, %s138
      %s140 = sphi 0, %s138
      %s141 = sphi 0, %s140
      %s155 = sphi 0, %s141
      %s159 = sphi 0, %s159
      %s161 = sphi 0, %s159
      %s162 = sphi 0, %s161
      %s176 = sphi 0, %s162
      %s180 = sphi 0, %s180
      %s182 = sphi 0, %s180
      %s183 = sphi 0, %s182
      %s197 = sphi 0, %s183
      %s201 = sphi 0, %s201
      %s203 = sphi 0, %s201
      %s204 = sphi 0, %s203
      %s218 = sphi 0, %s204
      %s224 = sphi 0, %s226
      %s227 = sphi 0, %s224
      %s228 = sphi 0, %s227
      %s244 = sphi 0, %s228
      %s250 = sphi 0, %s252
      %s253 = sphi 0, %s250
      %s254 = sphi 0, %s253
      %s270 = sphi 0, %s254
    $region4: #{mlp_ae_forward.1} parent=1 // loop_header_branch
      %23 = sbr.rel (%p21) target = $region8
    $region5: #{mlp_ae_forward.1} parent=1 // loop_body
      %s25 = ssub.s32 %s20, 1
      %s26 = ssub.s32 %s20, 2
      %s27 = sadd.s32 %s20, 1
      %s28 = ssub.s32 %s20, %s27
      %p29 = scmp.eq.s32.totalorder %s28, 0
      %s31 = sadd.s32 %s30, 1
      %s32 = scalar_select %p29, %s30, %s31
      %p35 = pneg %p29
      %p36 = scmp.eq.s32.totalorder %s20, 1
      %p37 = por %p35, %p36
      %p38 = scmp.ne.s32.totalorder %s30, %s33
      %p39 = scmp.eq.s32.totalorder %s20, 0
      %p40 = por %p38, %p39
      %p41 = scmp.ne.s32.totalorder %s30, %s33
      %p42 = scmp.eq.s32.totalorder %s25, 1
      %p43 = por %p41, %p42
      %p44 = scmp.ne.s32.totalorder %s33, %s34
      %p45 = scmp.eq.s32.totalorder %s25, 0
      %p46 = por %p44, %p45
      %p47 = scmp.ne.s32.totalorder %s33, %s34
      %p48 = scmp.eq.s32.totalorder %s26, 1
      %p49 = por %p47, %p48
      %p51 = scmp.ne.s32.totalorder %s34, %s50
      %p52 = scmp.eq.s32.totalorder %s26, 0
      %p53 = por %p51, %p52
      %s55 = sadd.s32 %s54, 1
      %p58 = scmp.eq.s32.totalorder %s20, 1
      %p59 = scmp.ne.s32.totalorder %s54, %s56
      %p60 = scmp.eq.s32.totalorder %s20, 0
      %p61 = por %p59, %p60
      %p62 = scmp.ne.s32.totalorder %s54, %s56
      %p63 = scmp.eq.s32.totalorder %s25, 1
      %p64 = por %p62, %p63
      %p65 = scmp.ne.s32.totalorder %s56, %s57
      %p66 = scmp.eq.s32.totalorder %s25, 0
      %p67 = por %p65, %p66
      %p68 = scmp.ne.s32.totalorder %s56, %s57
      %p69 = scmp.eq.s32.totalorder %s26, 1
      %p70 = por %p68, %p69
      %p72 = scmp.ne.s32.totalorder %s57, %s71
      %p73 = scmp.eq.s32.totalorder %s26, 0
      %p74 = por %p72, %p73
      %s76 = sadd.s32 %s75, 1
      %p79 = scmp.eq.s32.totalorder %s20, 1
      %p80 = scmp.ne.s32.totalorder %s75, %s77
      %p81 = scmp.eq.s32.totalorder %s20, 0
      %p82 = por %p80, %p81
      %p83 = scmp.ne.s32.totalorder %s75, %s77
      %p84 = scmp.eq.s32.totalorder %s25, 1
      %p85 = por %p83, %p84
      %p86 = scmp.ne.s32.totalorder %s77, %s78
      %p87 = scmp.eq.s32.totalorder %s25, 0
      %p88 = por %p86, %p87
      %p89 = scmp.ne.s32.totalorder %s77, %s78
      %p90 = scmp.eq.s32.totalorder %s26, 1
      %p91 = por %p89, %p90
      %p93 = scmp.ne.s32.totalorder %s78, %s92
      %p94 = scmp.eq.s32.totalorder %s26, 0
      %p95 = por %p93, %p94
      %s97 = sadd.s32 %s96, 1
      %p100 = scmp.eq.s32.totalorder %s20, 1
      %p101 = scmp.ne.s32.totalorder %s96, %s98
      %p102 = scmp.eq.s32.totalorder %s20, 0
      %p103 = por %p101, %p102
      %p104 = scmp.ne.s32.totalorder %s96, %s98
      %p105 = scmp.eq.s32.totalorder %s25, 1
      %p106 = por %p104, %p105
      %p107 = scmp.ne.s32.totalorder %s98, %s99
      %p108 = scmp.eq.s32.totalorder %s25, 0
      %p109 = por %p107, %p108
      %p110 = scmp.ne.s32.totalorder %s98, %s99
      %p111 = scmp.eq.s32.totalorder %s26, 1
      %p112 = por %p110, %p111
      %p114 = scmp.ne.s32.totalorder %s99, %s113
      %p115 = scmp.eq.s32.totalorder %s26, 0
      %p116 = por %p114, %p115
      %s118 = sadd.s32 %s117, 1
      %p121 = scmp.eq.s32.totalorder %s20, 1
      %p122 = scmp.ne.s32.totalorder %s117, %s119
      %p123 = scmp.eq.s32.totalorder %s20, 0
      %p124 = por %p122, %p123
      %p125 = scmp.ne.s32.totalorder %s117, %s119
      %p126 = scmp.eq.s32.totalorder %s25, 1
      %p127 = por %p125, %p126
      %p128 = scmp.ne.s32.totalorder %s119, %s120
      %p129 = scmp.eq.s32.totalorder %s25, 0
      %p130 = por %p128, %p129
      %p131 = scmp.ne.s32.totalorder %s119, %s120
      %p132 = scmp.eq.s32.totalorder %s26, 1
      %p133 = por %p131, %p132
      %p135 = scmp.ne.s32.totalorder %s120, %s134
      %p136 = scmp.eq.s32.totalorder %s26, 0
      %p137 = por %p135, %p136
      %s139 = sadd.s32 %s138, 1
      %p142 = scmp.eq.s32.totalorder %s20, 1
      %p143 = scmp.ne.s32.totalorder %s138, %s140
      %p144 = scmp.eq.s32.totalorder %s20, 0
      %p145 = por %p143, %p144
      %p146 = scmp.ne.s32.totalorder %s138, %s140
      %p147 = scmp.eq.s32.totalorder %s25, 1
      %p148 = por %p146, %p147
      %p149 = scmp.ne.s32.totalorder %s140, %s141
      %p150 = scmp.eq.s32.totalorder %s25, 0
      %p151 = por %p149, %p150
      %p152 = scmp.ne.s32.totalorder %s140, %s141
      %p153 = scmp.eq.s32.totalorder %s26, 1
      %p154 = por %p152, %p153
      %p156 = scmp.ne.s32.totalorder %s141, %s155
      %p157 = scmp.eq.s32.totalorder %s26, 0
      %p158 = por %p156, %p157
      %s160 = sadd.s32 %s159, 1
      %p163 = scmp.eq.s32.totalorder %s20, 1
      %p164 = scmp.ne.s32.totalorder %s159, %s161
      %p165 = scmp.eq.s32.totalorder %s20, 0
      %p166 = por %p164, %p165
      %p167 = scmp.ne.s32.totalorder %s159, %s161
      %p168 = scmp.eq.s32.totalorder %s25, 1
      %p169 = por %p167, %p168
      %p170 = scmp.ne.s32.totalorder %s161, %s162
      %p171 = scmp.eq.s32.totalorder %s25, 0
      %p172 = por %p170, %p171
      %p173 = scmp.ne.s32.totalorder %s161, %s162
      %p174 = scmp.eq.s32.totalorder %s26, 1
      %p175 = por %p173, %p174
      %p177 = scmp.ne.s32.totalorder %s162, %s176
      %p178 = scmp.eq.s32.totalorder %s26, 0
      %p179 = por %p177, %p178
      %s181 = sadd.s32 %s180, 1
      %p184 = scmp.eq.s32.totalorder %s20, 1
      %p185 = scmp.ne.s32.totalorder %s180, %s182
      %p186 = scmp.eq.s32.totalorder %s20, 0
      %p187 = por %p185, %p186
      %p188 = scmp.ne.s32.totalorder %s180, %s182
      %p189 = scmp.eq.s32.totalorder %s25, 1
      %p190 = por %p188, %p189
      %p191 = scmp.ne.s32.totalorder %s182, %s183
      %p192 = scmp.eq.s32.totalorder %s25, 0
      %p193 = por %p191, %p192
      %p194 = scmp.ne.s32.totalorder %s182, %s183
      %p195 = scmp.eq.s32.totalorder %s26, 1
      %p196 = por %p194, %p195
      %p198 = scmp.ne.s32.totalorder %s183, %s197
      %p199 = scmp.eq.s32.totalorder %s26, 0
      %p200 = por %p198, %p199
      %s202 = sadd.s32 %s201, 1
      %p205 = scmp.eq.s32.totalorder %s20, 1
      %p206 = scmp.ne.s32.totalorder %s201, %s203
      %p207 = scmp.eq.s32.totalorder %s20, 0
      %p208 = por %p206, %p207
      %p209 = scmp.ne.s32.totalorder %s201, %s203
      %p210 = scmp.eq.s32.totalorder %s25, 1
      %p211 = por %p209, %p210
      %p212 = scmp.ne.s32.totalorder %s203, %s204
      %p213 = scmp.eq.s32.totalorder %s25, 0
      %p214 = por %p212, %p213
      %p215 = scmp.ne.s32.totalorder %s203, %s204
      %p216 = scmp.eq.s32.totalorder %s26, 1
      %p217 = por %p215, %p216
      %p219 = scmp.ne.s32.totalorder %s204, %s218
      %p220 = scmp.eq.s32.totalorder %s26, 0
      %p221 = por %p219, %p220
      %s222 = ssub.s32 %s20, %s27
      %p223 = scmp.eq.s32.totalorder %s222, 0
      %s225 = sadd.s32 %s224, 1
      %s226 = scalar_select %p223, %s224, %s225
      %p229 = pneg %p223
      %p230 = scmp.eq.s32.totalorder %s20, 1
      %p231 = por %p229, %p230
      %p232 = scmp.ne.s32.totalorder %s224, %s227
      %p233 = scmp.eq.s32.totalorder %s20, 0
      %p234 = por %p232, %p233
      %p235 = scmp.ne.s32.totalorder %s224, %s227
      %p236 = scmp.eq.s32.totalorder %s25, 1
      %p237 = por %p235, %p236
      %p238 = scmp.ne.s32.totalorder %s227, %s228
      %p239 = scmp.eq.s32.totalorder %s25, 0
      %p240 = por %p238, %p239
      %p241 = scmp.ne.s32.totalorder %s227, %s228
      %p242 = scmp.eq.s32.totalorder %s26, 1
      %p243 = por %p241, %p242
      %p245 = scmp.ne.s32.totalorder %s228, %s244
      %p246 = scmp.eq.s32.totalorder %s26, 0
      %p247 = por %p245, %p246
      %s248 = ssub.s32 %s20, %s27
      %p249 = scmp.eq.s32.totalorder %s248, 0
      %s251 = sadd.s32 %s250, 1
      %s252 = scalar_select %p249, %s250, %s251
      %p255 = pneg %p249
      %p256 = scmp.eq.s32.totalorder %s20, 1
      %p257 = por %p255, %p256
      %p258 = scmp.ne.s32.totalorder %s250, %s253
      %p259 = scmp.eq.s32.totalorder %s20, 0
      %p260 = por %p258, %p259
      %p261 = scmp.ne.s32.totalorder %s250, %s253
      %p262 = scmp.eq.s32.totalorder %s25, 1
      %p263 = por %p261, %p262
      %p264 = scmp.ne.s32.totalorder %s253, %s254
      %p265 = scmp.eq.s32.totalorder %s25, 0
      %p266 = por %p264, %p265
      %p267 = scmp.ne.s32.totalorder %s253, %s254
      %p268 = scmp.eq.s32.totalorder %s26, 1
      %p269 = por %p267, %p268
      %p271 = scmp.ne.s32.totalorder %s254, %s270
      %p272 = scmp.eq.s32.totalorder %s26, 0
      %p273 = por %p271, %p272
      %p274 = scmp.le.s32.totalorder 1, %s20
      %p275 = scmp.lt.s32.totalorder %s20, 3
      %p276 = pnand %p274, %p275
      %p277 = pneg %p276
      // Predicated region
      $region9: #{mlp_ae_forward.1} parent=5 // pred_check
        _
      $region10: #{mlp_ae_forward.1} parent=5 // pred_check_branch
        %279 = sbr.rel (%p276) target = $region12
      $region11: #{mlp_ae_forward.1} parent=5 // pred_region
        %s280 = ssub.s32 %s20, 1
        // Predicated region
        $region13: #{mlp_ae_forward.1} parent=11 // pred_check
          %p281 = pneg %p67
        $region14: #{mlp_ae_forward.1} parent=11 // pred_check_branch
          %283 = sbr.rel (%p281) target = $region16
        $region15: #{mlp_ae_forward.1} parent=11 // pred_region
          %s285 = ssub.s32 2048, 2048
          %286 = vsyncadd [#allocation3], %s285
          %s287 = sshll.u32 [#allocation2], 4
          %s288 = int_to_ptr.vmem [resolvable:$true] %s287
          %293 = dma.hbm_to_vmem [thread:$0]  %s1, 2048, %s288, [#allocation3], 128, 128, 8
        $region16: #{mlp_ae_forward.1} parent=11 // pred_fallthru
          _
        // Predicated region
        $region17: #{mlp_ae_forward.1} parent=11 // pred_check
          %p294 = pneg %p88
        $region18: #{mlp_ae_forward.1} parent=11 // pred_check_branch
          %296 = sbr.rel (%p294) target = $region20
        $region19: #{mlp_ae_forward.1} parent=11 // pred_region
          _
        $region20: #{mlp_ae_forward.1} parent=11 // pred_fallthru
          _
        // Predicated region
        $region21: #{mlp_ae_forward.1} parent=11 // pred_check
          %p297 = pneg %p109
        $region22: #{mlp_ae_forward.1} parent=11 // pred_check_branch
          %299 = sbr.rel (%p297) target = $region24
        $region23: #{mlp_ae_forward.1} parent=11 // pred_region
          %s301 = ssub.s32 2048, 2048
          %302 = vsyncadd [#allocation5], %s301
          %s303 = sshll.u32 [#allocation4], 4
          %s304 = int_to_ptr.vmem [resolvable:$true] %s303
          %309 = dma.hbm_to_vmem [thread:$0]  %s3, 2048, %s304, [#allocation5], 128, 128, 8
        $region24: #{mlp_ae_forward.1} parent=11 // pred_fallthru
          _
        // Predicated region
        $region25: #{mlp_ae_forward.1} parent=11 // pred_check
          %p310 = pneg %p130
        $region26: #{mlp_ae_forward.1} parent=11 // pred_check_branch
          %312 = sbr.rel (%p310) target = $region28
        $region27: #{mlp_ae_forward.1} parent=11 // pred_region
          _
        $region28: #{mlp_ae_forward.1} parent=11 // pred_fallthru
          _
        // Predicated region
        $region29: #{mlp_ae_forward.1} parent=11 // pred_check
          %p313 = pneg %p151
        $region30: #{mlp_ae_forward.1} parent=11 // pred_check_branch
          %315 = sbr.rel (%p313) target = $region32
        $region31: #{mlp_ae_forward.1} parent=11 // pred_region
          %s317 = ssub.s32 2048, 2048
          %318 = vsyncadd [#allocation5], %s317
          %s319 = sshll.u32 [#allocation6], 4
          %s320 = int_to_ptr.vmem [resolvable:$true] %s319
          %325 = dma.hbm_to_vmem [thread:$0]  %s5, 2048, %s320, [#allocation5], 128, 128, 8
        $region32: #{mlp_ae_forward.1} parent=11 // pred_fallthru
          _
        // Predicated region
        $region33: #{mlp_ae_forward.1} parent=11 // pred_check
          %p326 = pneg %p172
        $region34: #{mlp_ae_forward.1} parent=11 // pred_check_branch
          %328 = sbr.rel (%p326) target = $region36
        $region35: #{mlp_ae_forward.1} parent=11 // pred_region
          _
        $region36: #{mlp_ae_forward.1} parent=11 // pred_fallthru
          _
        // Predicated region
        $region37: #{mlp_ae_forward.1} parent=11 // pred_check
          %p329 = pneg %p193
        $region38: #{mlp_ae_forward.1} parent=11 // pred_check_branch
          %331 = sbr.rel (%p329) target = $region40
        $region39: #{mlp_ae_forward.1} parent=11 // pred_region
          %s333 = ssub.s32 2048, 2048
          %334 = vsyncadd [#allocation8], %s333
          %s335 = sshll.u32 [#allocation7], 4
          %s336 = int_to_ptr.vmem [resolvable:$true] %s335
          %341 = dma.hbm_to_vmem [thread:$0]  %s7, 2048, %s336, [#allocation8], 128, 128, 8
        $region40: #{mlp_ae_forward.1} parent=11 // pred_fallthru
          _
        // Predicated region
        $region41: #{mlp_ae_forward.1} parent=11 // pred_check
          %p342 = pneg %p214
        $region42: #{mlp_ae_forward.1} parent=11 // pred_check_branch
          %344 = sbr.rel (%p342) target = $region44
        $region43: #{mlp_ae_forward.1} parent=11 // pred_region
          _
        $region44: #{mlp_ae_forward.1} parent=11 // pred_fallthru
          _
      $region12: #{mlp_ae_forward.1} parent=5 // pred_fallthru
        _
      %p345 = scmp.lt.s32.totalorder %s20, 2
      // Predicated region
      $region45: #{mlp_ae_forward.1} parent=5 // pred_check
        %p346 = pneg %p345
      $region46: #{mlp_ae_forward.1} parent=5 // pred_check_branch
        %348 = sbr.rel (%p346) target = $region48
      $region47: #{mlp_ae_forward.1} parent=5 // pred_region
        // Predicated region
        $region49: #{mlp_ae_forward.1} parent=47 // pred_check
          %p349 = pneg %p40
        $region50: #{mlp_ae_forward.1} parent=47 // pred_check_branch
          %351 = sbr.rel (%p349) target = $region52
        $region51: #{mlp_ae_forward.1} parent=47 // pred_region
          %p352 = scmp.lt.s32.totalorder %s20, 1
          %s353 = scalar_select %p352, %s20, 1
          %s354 = smul.addr %s353, 8
          %s355 = scalar_lea.vmem %s0, %s354
        $region52: #{mlp_ae_forward.1} parent=47 // pred_fallthru
          _
      $region48: #{mlp_ae_forward.1} parent=5 // pred_fallthru
        _
      %p356 = scmp.le.s32.totalorder 1, %s20
      %p357 = scmp.lt.s32.totalorder %s20, 3
      %p358 = pnand %p356, %p357
      %p359 = pneg %p358
      // Predicated region
      $region53: #{mlp_ae_forward.1} parent=5 // pred_check
        _
      $region54: #{mlp_ae_forward.1} parent=5 // pred_check_branch
        %361 = sbr.rel (%p358) target = $region56
      $region55: #{mlp_ae_forward.1} parent=5 // pred_region
        %s362 = ssub.s32 %s20, 1
        // Predicated region
        $region57: #{mlp_ae_forward.1} parent=55 // pred_check
          %p363 = pneg %p67
        $region58: #{mlp_ae_forward.1} parent=55 // pred_check_branch
          %365 = sbr.rel (%p363) target = $region60
        $region59: #{mlp_ae_forward.1} parent=55 // pred_region
          %366 = dma.done [#allocation3], 2048
        $region60: #{mlp_ae_forward.1} parent=55 // pred_fallthru
          _
        // Predicated region
        $region61: #{mlp_ae_forward.1} parent=55 // pred_check
          %p367 = pneg %p109
        $region62: #{mlp_ae_forward.1} parent=55 // pred_check_branch
          %369 = sbr.rel (%p367) target = $region64
        $region63: #{mlp_ae_forward.1} parent=55 // pred_region
          %370 = dma.done [#allocation5], 2048
        $region64: #{mlp_ae_forward.1} parent=55 // pred_fallthru
          _
        // Predicated region
        $region65: #{mlp_ae_forward.1} parent=55 // pred_check
          %p371 = pneg %p151
        $region66: #{mlp_ae_forward.1} parent=55 // pred_check_branch
          %373 = sbr.rel (%p371) target = $region68
        $region67: #{mlp_ae_forward.1} parent=55 // pred_region
          %374 = dma.done [#allocation5], 2048
        $region68: #{mlp_ae_forward.1} parent=55 // pred_fallthru
          _
        // Predicated region
        $region69: #{mlp_ae_forward.1} parent=55 // pred_check
          %p375 = pneg %p193
        $region70: #{mlp_ae_forward.1} parent=55 // pred_check_branch
          %377 = sbr.rel (%p375) target = $region72
        $region71: #{mlp_ae_forward.1} parent=55 // pred_region
          %378 = dma.done [#allocation8], 2048
        $region72: #{mlp_ae_forward.1} parent=55 // pred_fallthru
          _
        %p379 = scmp.lt.s32.totalorder %s25, 1
        %s380 = scalar_select %p379, %s25, 1
        %s381 = smul.addr %s380, 8
        %s382 = scalar_lea.vmem %s0, %s381
        %p383 = pneg %p46
        %p384 = pneg %p43
        %p385 = pneg %p67
        %p386 = pneg %p64
        %p387 = pneg %p88
        %p388 = pneg %p85
        %p389 = pneg %p109
        %p390 = pneg %p106
        %p391 = pneg %p130
        %p392 = pneg %p127
        %p393 = pneg %p151
        %p394 = pneg %p148
        %p395 = pneg %p172
        %p396 = pneg %p169
        %p397 = pneg %p193
        %p398 = pneg %p190
        %p399 = pneg %p214
        %p400 = pneg %p211
        %p401 = pneg %p240
        %p402 = pneg %p237
        %p403 = scmp.lt.s32.totalorder %s25, 1
        %s404 = scalar_select %p403, %s25, 1
        %s405 = smul.addr %s404, 8
        %s406 = scalar_lea.vmem %s9, %s405
        %p407 = pneg %p266
        %p408 = pneg %p263
        %p409 = scmp.lt.s32.totalorder %s25, 1
        %s410 = scalar_select %p409, %s25, 1
        %s411 = smul.addr %s410, 8
        %s412 = scalar_lea.vmem %s10, %s411
        %p413 = scmp.lt.s32.totalorder %s25, 1
        %s414 = scalar_select %p413, %s25, 1
        %s415 = smul.addr %s414, 8
        %s416 = scalar_lea.vmem %s0, %s415
        %p417 = scmp.lt.s32.totalorder %s25, 1
        %s418 = scalar_select %p417, %s25, 1
        %s419 = smul.addr %s418, 8
        %s420 = scalar_lea.vmem %s9, %s419
        %p421 = scmp.lt.s32.totalorder %s25, 1
        %s422 = scalar_select %p421, %s25, 1
        %s423 = smul.addr %s422, 8
        %s424 = scalar_lea.vmem %s10, %s423
        %v425 = vld [vmem:[%s416] sm:$0xff]
        %v426 = vld [vmem:[#allocation2] sm:$0xff]
        %v427 = vld [vmem:[#allocation2 + $0x8] sm:$0xff]
        %v428 = vld [vmem:[#allocation2 + $0x10] sm:$0xff]
        %v429 = vld [vmem:[#allocation2 + $0x18] sm:$0xff]
        %v430 = vld [vmem:[#allocation2 + $0x20] sm:$0xff]
        %v431 = vld [vmem:[#allocation2 + $0x28] sm:$0xff]
        %v432 = vld [vmem:[#allocation2 + $0x30] sm:$0xff]
        %v433 = vld [vmem:[#allocation2 + $0x38] sm:$0xff]
        %v434 = vld [vmem:[#allocation2 + $0x40] sm:$0xff]
        %v435 = vld [vmem:[#allocation2 + $0x48] sm:$0xff]
        %v436 = vld [vmem:[#allocation2 + $0x50] sm:$0xff]
        %v437 = vld [vmem:[#allocation2 + $0x58] sm:$0xff]
        %v438 = vld [vmem:[#allocation2 + $0x60] sm:$0xff]
        %v439 = vld [vmem:[#allocation2 + $0x68] sm:$0xff]
        %v440 = vld [vmem:[#allocation2 + $0x70] sm:$0xff]
        %v441 = vld [vmem:[#allocation2 + $0x78] sm:$0xff]
        %v442 = vld [vmem:[%s2] sm:$0x1]
        %v444 = vlaneseq
        %v445 = vshrl.u32 %v444, 7
        %v446 = vsub.s32 0, %v445
        %v447 = vrot.slane %v442, %v446
        %449 = vmatprep.subr.mxu0 0.0
        %450 = vmatpush1.msra.mxu0 %v441
        %451 = vmatprep.subr.mxu0 0.0
        %452 = vmatpush1.msra.mxu0 %v440
        %453 = vmatprep.subr.mxu0 0.0
        %454 = vmatpush1.msra.mxu0 %v439
        %455 = vmatprep.subr.mxu0 0.0
        %456 = vmatpush1.msra.mxu0 %v438
        %457 = vmatprep.subr.mxu0 0.0
        %458 = vmatpush1.msra.mxu0 %v437
        %459 = vmatprep.subr.mxu0 0.0
        %460 = vmatpush1.msra.mxu0 %v436
        %461 = vmatprep.subr.mxu0 0.0
        %462 = vmatpush1.msra.mxu0 %v435
        %463 = vmatprep.subr.mxu0 0.0
        %464 = vmatpush1.msra.mxu0 %v434
        %465 = vmatprep.subr.mxu0 0.0
        %466 = vmatpush1.msra.mxu0 %v433
        %467 = vmatprep.subr.mxu0 0.0
        %468 = vmatpush1.msra.mxu0 %v432
        %469 = vmatprep.subr.mxu0 0.0
        %470 = vmatpush1.msra.mxu0 %v431
        %471 = vmatprep.subr.mxu0 0.0
        %472 = vmatpush1.msra.mxu0 %v430
        %473 = vmatprep.subr.mxu0 0.0
        %474 = vmatpush1.msra.mxu0 %v429
        %475 = vmatprep.subr.mxu0 0.0
        %476 = vmatpush1.msra.mxu0 %v428
        %477 = vmatprep.subr.mxu0 0.0
        %478 = vmatpush1.msra.mxu0 %v427
        %479 = vmatprep.subr.mxu0 0.0
        %480 = vmatpush1.msra.mxu0 %v426
        %481 = vmatprep.subr.mxu0 0.0
        %482 = vmatpush2.msra.mxu0 0.0
        %483 = vmatprep.subr.mxu0 0.0
        %484 = vmatpush2.msra.mxu0 0.0
        %485 = vmatprep.subr.mxu0 0.0
        %486 = vmatpush2.msra.mxu0 0.0
        %487 = vmatprep.subr.mxu0 0.0
        %488 = vmatpush2.msra.mxu0 0.0
        %489 = vmatprep.subr.mxu0 0.0
        %490 = vmatpush2.msra.mxu0 0.0
        %491 = vmatprep.subr.mxu0 0.0
        %492 = vmatpush2.msra.mxu0 0.0
        %493 = vmatprep.subr.mxu0 0.0
        %494 = vmatpush2.msra.mxu0 0.0
        %495 = vmatprep.subr.mxu0 0.0
        %496 = vmatpush2.msra.mxu0 0.0
        %497 = vmatprep.subr.mxu0 0.0
        %498 = vmatpush2.msra.mxu0 0.0
        %499 = vmatprep.subr.mxu0 0.0
        %500 = vmatpush2.msra.mxu0 0.0
        %501 = vmatprep.subr.mxu0 0.0
        %502 = vmatpush2.msra.mxu0 0.0
        %503 = vmatprep.subr.mxu0 0.0
        %504 = vmatpush2.msra.mxu0 0.0
        %505 = vmatprep.subr.mxu0 0.0
        %506 = vmatpush2.msra.mxu0 0.0
        %507 = vmatprep.subr.mxu0 0.0
        %508 = vmatpush2.msra.mxu0 0.0
        %509 = vmatprep.subr.mxu0 0.0
        %510 = vmatpush2.msra.mxu0 0.0
        %511 = vmatprep.subr.mxu0 0.0
        %512 = vmatpush2.msra.mxu0 0.0
        %513 = vmatprep.mubr.f32.mxu0 0.0
        %514 = vmatmul.mubr.f32.gmra.mxu0 %v425
        %v515 = vpop.f32.mrf.mxu0
        %v516 = vadd.f32 %v447, %v515
        %v517 = vpop.f32.mrf.mxu0
        %518 = vdwg.mxu0
        %v519 = vmax.f32 %v516, 0.0
        %v520 = vld [vmem:[#allocation4] sm:$0xff]
        %v521 = vld [vmem:[#allocation4 + $0x8] sm:$0xff]
        %v522 = vld [vmem:[#allocation4 + $0x10] sm:$0xff]
        %v523 = vld [vmem:[#allocation4 + $0x18] sm:$0xff]
        %v524 = vld [vmem:[#allocation4 + $0x20] sm:$0xff]
        %v525 = vld [vmem:[#allocation4 + $0x28] sm:$0xff]
        %v526 = vld [vmem:[#allocation4 + $0x30] sm:$0xff]
        %v527 = vld [vmem:[#allocation4 + $0x38] sm:$0xff]
        %v528 = vld [vmem:[#allocation4 + $0x40] sm:$0xff]
        %v529 = vld [vmem:[#allocation4 + $0x48] sm:$0xff]
        %v530 = vld [vmem:[#allocation4 + $0x50] sm:$0xff]
        %v531 = vld [vmem:[#allocation4 + $0x58] sm:$0xff]
        %v532 = vld [vmem:[#allocation4 + $0x60] sm:$0xff]
        %v533 = vld [vmem:[#allocation4 + $0x68] sm:$0xff]
        %v534 = vld [vmem:[#allocation4 + $0x70] sm:$0xff]
        %v535 = vld [vmem:[#allocation4 + $0x78] sm:$0xff]
        %v536 = vld [vmem:[%s4] sm:$0x1]
        %v538 = vlaneseq
        %v539 = vshrl.u32 %v538, 7
        %v540 = vsub.s32 0, %v539
        %v541 = vrot.slane %v536, %v540
        %543 = vmatprep.subr.mxu0 0.0
        %544 = vmatpush1.msra.mxu0 %v535
        %545 = vmatprep.subr.mxu0 0.0
        %546 = vmatpush1.msra.mxu0 %v534
        %547 = vmatprep.subr.mxu0 0.0
        %548 = vmatpush1.msra.mxu0 %v533
        %549 = vmatprep.subr.mxu0 0.0
        %550 = vmatpush1.msra.mxu0 %v532
        %551 = vmatprep.subr.mxu0 0.0
        %552 = vmatpush1.msra.mxu0 %v531
        %553 = vmatprep.subr.mxu0 0.0
        %554 = vmatpush1.msra.mxu0 %v530
        %555 = vmatprep.subr.mxu0 0.0
        %556 = vmatpush1.msra.mxu0 %v529
        %557 = vmatprep.subr.mxu0 0.0
        %558 = vmatpush1.msra.mxu0 %v528
        %559 = vmatprep.subr.mxu0 0.0
        %560 = vmatpush1.msra.mxu0 %v527
        %561 = vmatprep.subr.mxu0 0.0
        %562 = vmatpush1.msra.mxu0 %v526
        %563 = vmatprep.subr.mxu0 0.0
        %564 = vmatpush1.msra.mxu0 %v525
        %565 = vmatprep.subr.mxu0 0.0
        %566 = vmatpush1.msra.mxu0 %v524
        %567 = vmatprep.subr.mxu0 0.0
        %568 = vmatpush1.msra.mxu0 %v523
        %569 = vmatprep.subr.mxu0 0.0
        %570 = vmatpush1.msra.mxu0 %v522
        %571 = vmatprep.subr.mxu0 0.0
        %572 = vmatpush1.msra.mxu0 %v521
        %573 = vmatprep.subr.mxu0 0.0
        %574 = vmatpush1.msra.mxu0 %v520
        %575 = vmatprep.subr.mxu0 0.0
        %576 = vmatpush2.msra.mxu0 0.0
        %577 = vmatprep.subr.mxu0 0.0
        %578 = vmatpush2.msra.mxu0 0.0
        %579 = vmatprep.subr.mxu0 0.0
        %580 = vmatpush2.msra.mxu0 0.0
        %581 = vmatprep.subr.mxu0 0.0
        %582 = vmatpush2.msra.mxu0 0.0
        %583 = vmatprep.subr.mxu0 0.0
        %584 = vmatpush2.msra.mxu0 0.0
        %585 = vmatprep.subr.mxu0 0.0
        %586 = vmatpush2.msra.mxu0 0.0
        %587 = vmatprep.subr.mxu0 0.0
        %588 = vmatpush2.msra.mxu0 0.0
        %589 = vmatprep.subr.mxu0 0.0
        %590 = vmatpush2.msra.mxu0 0.0
        %591 = vmatprep.subr.mxu0 0.0
        %592 = vmatpush2.msra.mxu0 0.0
        %593 = vmatprep.subr.mxu0 0.0
        %594 = vmatpush2.msra.mxu0 0.0
        %595 = vmatprep.subr.mxu0 0.0
        %596 = vmatpush2.msra.mxu0 0.0
        %597 = vmatprep.subr.mxu0 0.0
        %598 = vmatpush2.msra.mxu0 0.0
        %599 = vmatprep.subr.mxu0 0.0
        %600 = vmatpush2.msra.mxu0 0.0
        %601 = vmatprep.subr.mxu0 0.0
        %602 = vmatpush2.msra.mxu0 0.0
        %603 = vmatprep.subr.mxu0 0.0
        %604 = vmatpush2.msra.mxu0 0.0
        %605 = vmatprep.subr.mxu0 0.0
        %606 = vmatpush2.msra.mxu0 0.0
        %607 = vmatprep.mubr.f32.mxu0 0.0
        %608 = vmatmul.mubr.f32.gmra.mxu0 %v519
        %v609 = vpop.f32.mrf.mxu0
        %v610 = vadd.f32 %v541, %v609
        %v611 = vpop.f32.mrf.mxu0
        %612 = vdwg.mxu0
        %613 = vst [vmem:[%s424] sm:$0xff] %v610
        %v614 = vld [vmem:[#allocation6] sm:$0xff]
        %v615 = vld [vmem:[#allocation6 + $0x8] sm:$0xff]
        %v616 = vld [vmem:[#allocation6 + $0x10] sm:$0xff]
        %v617 = vld [vmem:[#allocation6 + $0x18] sm:$0xff]
        %v618 = vld [vmem:[#allocation6 + $0x20] sm:$0xff]
        %v619 = vld [vmem:[#allocation6 + $0x28] sm:$0xff]
        %v620 = vld [vmem:[#allocation6 + $0x30] sm:$0xff]
        %v621 = vld [vmem:[#allocation6 + $0x38] sm:$0xff]
        %v622 = vld [vmem:[#allocation6 + $0x40] sm:$0xff]
        %v623 = vld [vmem:[#allocation6 + $0x48] sm:$0xff]
        %v624 = vld [vmem:[#allocation6 + $0x50] sm:$0xff]
        %v625 = vld [vmem:[#allocation6 + $0x58] sm:$0xff]
        %v626 = vld [vmem:[#allocation6 + $0x60] sm:$0xff]
        %v627 = vld [vmem:[#allocation6 + $0x68] sm:$0xff]
        %v628 = vld [vmem:[#allocation6 + $0x70] sm:$0xff]
        %v629 = vld [vmem:[#allocation6 + $0x78] sm:$0xff]
        %v630 = vld [vmem:[%s6] sm:$0x1]
        %v632 = vlaneseq
        %v633 = vshrl.u32 %v632, 7
        %v634 = vsub.s32 0, %v633
        %v635 = vrot.slane %v630, %v634
        %637 = vmatprep.subr.mxu0 0.0
        %638 = vmatpush1.msra.mxu0 %v629
        %639 = vmatprep.subr.mxu0 0.0
        %640 = vmatpush1.msra.mxu0 %v628
        %641 = vmatprep.subr.mxu0 0.0
        %642 = vmatpush1.msra.mxu0 %v627
        %643 = vmatprep.subr.mxu0 0.0
        %644 = vmatpush1.msra.mxu0 %v626
        %645 = vmatprep.subr.mxu0 0.0
        %646 = vmatpush1.msra.mxu0 %v625
        %647 = vmatprep.subr.mxu0 0.0
        %648 = vmatpush1.msra.mxu0 %v624
        %649 = vmatprep.subr.mxu0 0.0
        %650 = vmatpush1.msra.mxu0 %v623
        %651 = vmatprep.subr.mxu0 0.0
        %652 = vmatpush1.msra.mxu0 %v622
        %653 = vmatprep.subr.mxu0 0.0
        %654 = vmatpush1.msra.mxu0 %v621
        %655 = vmatprep.subr.mxu0 0.0
        %656 = vmatpush1.msra.mxu0 %v620
        %657 = vmatprep.subr.mxu0 0.0
        %658 = vmatpush1.msra.mxu0 %v619
        %659 = vmatprep.subr.mxu0 0.0
        %660 = vmatpush1.msra.mxu0 %v618
        %661 = vmatprep.subr.mxu0 0.0
        %662 = vmatpush1.msra.mxu0 %v617
        %663 = vmatprep.subr.mxu0 0.0
        %664 = vmatpush1.msra.mxu0 %v616
        %665 = vmatprep.subr.mxu0 0.0
        %666 = vmatpush1.msra.mxu0 %v615
        %667 = vmatprep.subr.mxu0 0.0
        %668 = vmatpush1.msra.mxu0 %v614
        %669 = vmatprep.subr.mxu0 0.0
        %670 = vmatpush2.msra.mxu0 0.0
        %671 = vmatprep.subr.mxu0 0.0
        %672 = vmatpush2.msra.mxu0 0.0
        %673 = vmatprep.subr.mxu0 0.0
        %674 = vmatpush2.msra.mxu0 0.0
        %675 = vmatprep.subr.mxu0 0.0
        %676 = vmatpush2.msra.mxu0 0.0
        %677 = vmatprep.subr.mxu0 0.0
        %678 = vmatpush2.msra.mxu0 0.0
        %679 = vmatprep.subr.mxu0 0.0
        %680 = vmatpush2.msra.mxu0 0.0
        %681 = vmatprep.subr.mxu0 0.0
        %682 = vmatpush2.msra.mxu0 0.0
        %683 = vmatprep.subr.mxu0 0.0
        %684 = vmatpush2.msra.mxu0 0.0
        %685 = vmatprep.subr.mxu0 0.0
        %686 = vmatpush2.msra.mxu0 0.0
        %687 = vmatprep.subr.mxu0 0.0
        %688 = vmatpush2.msra.mxu0 0.0
        %689 = vmatprep.subr.mxu0 0.0
        %690 = vmatpush2.msra.mxu0 0.0
        %691 = vmatprep.subr.mxu0 0.0
        %692 = vmatpush2.msra.mxu0 0.0
        %693 = vmatprep.subr.mxu0 0.0
        %694 = vmatpush2.msra.mxu0 0.0
        %695 = vmatprep.subr.mxu0 0.0
        %696 = vmatpush2.msra.mxu0 0.0
        %697 = vmatprep.subr.mxu0 0.0
        %698 = vmatpush2.msra.mxu0 0.0
        %699 = vmatprep.subr.mxu0 0.0
        %700 = vmatpush2.msra.mxu0 0.0
        %701 = vmatprep.mubr.f32.mxu0 0.0
        %702 = vmatmul.mubr.f32.gmra.mxu0 %v610
        %v703 = vpop.f32.mrf.mxu0
        %v704 = vadd.f32 %v635, %v703
        %v705 = vpop.f32.mrf.mxu0
        %706 = vdwg.mxu0
        %v707 = vmax.f32 %v704, 0.0
        %v708 = vld [vmem:[#allocation7] sm:$0xff]
        %v709 = vld [vmem:[#allocation7 + $0x8] sm:$0xff]
        %v710 = vld [vmem:[#allocation7 + $0x10] sm:$0xff]
        %v711 = vld [vmem:[#allocation7 + $0x18] sm:$0xff]
        %v712 = vld [vmem:[#allocation7 + $0x20] sm:$0xff]
        %v713 = vld [vmem:[#allocation7 + $0x28] sm:$0xff]
        %v714 = vld [vmem:[#allocation7 + $0x30] sm:$0xff]
        %v715 = vld [vmem:[#allocation7 + $0x38] sm:$0xff]
        %v716 = vld [vmem:[#allocation7 + $0x40] sm:$0xff]
        %v717 = vld [vmem:[#allocation7 + $0x48] sm:$0xff]
        %v718 = vld [vmem:[#allocation7 + $0x50] sm:$0xff]
        %v719 = vld [vmem:[#allocation7 + $0x58] sm:$0xff]
        %v720 = vld [vmem:[#allocation7 + $0x60] sm:$0xff]
        %v721 = vld [vmem:[#allocation7 + $0x68] sm:$0xff]
        %v722 = vld [vmem:[#allocation7 + $0x70] sm:$0xff]
        %v723 = vld [vmem:[#allocation7 + $0x78] sm:$0xff]
        %v724 = vld [vmem:[%s8] sm:$0x1]
        %v726 = vlaneseq
        %v727 = vshrl.u32 %v726, 7
        %v728 = vsub.s32 0, %v727
        %v729 = vrot.slane %v724, %v728
        %731 = vmatprep.subr.mxu0 0.0
        %732 = vmatpush1.msra.mxu0 %v723
        %733 = vmatprep.subr.mxu0 0.0
        %734 = vmatpush1.msra.mxu0 %v722
        %735 = vmatprep.subr.mxu0 0.0
        %736 = vmatpush1.msra.mxu0 %v721
        %737 = vmatprep.subr.mxu0 0.0
        %738 = vmatpush1.msra.mxu0 %v720
        %739 = vmatprep.subr.mxu0 0.0
        %740 = vmatpush1.msra.mxu0 %v719
        %741 = vmatprep.subr.mxu0 0.0
        %742 = vmatpush1.msra.mxu0 %v718
        %743 = vmatprep.subr.mxu0 0.0
        %744 = vmatpush1.msra.mxu0 %v717
        %745 = vmatprep.subr.mxu0 0.0
        %746 = vmatpush1.msra.mxu0 %v716
        %747 = vmatprep.subr.mxu0 0.0
        %748 = vmatpush1.msra.mxu0 %v715
        %749 = vmatprep.subr.mxu0 0.0
        %750 = vmatpush1.msra.mxu0 %v714
        %751 = vmatprep.subr.mxu0 0.0
        %752 = vmatpush1.msra.mxu0 %v713
        %753 = vmatprep.subr.mxu0 0.0
        %754 = vmatpush1.msra.mxu0 %v712
        %755 = vmatprep.subr.mxu0 0.0
        %756 = vmatpush1.msra.mxu0 %v711
        %757 = vmatprep.subr.mxu0 0.0
        %758 = vmatpush1.msra.mxu0 %v710
        %759 = vmatprep.subr.mxu0 0.0
        %760 = vmatpush1.msra.mxu0 %v709
        %761 = vmatprep.subr.mxu0 0.0
        %762 = vmatpush1.msra.mxu0 %v708
        %763 = vmatprep.subr.mxu0 0.0
        %764 = vmatpush2.msra.mxu0 0.0
        %765 = vmatprep.subr.mxu0 0.0
        %766 = vmatpush2.msra.mxu0 0.0
        %767 = vmatprep.subr.mxu0 0.0
        %768 = vmatpush2.msra.mxu0 0.0
        %769 = vmatprep.subr.mxu0 0.0
        %770 = vmatpush2.msra.mxu0 0.0
        %771 = vmatprep.subr.mxu0 0.0
        %772 = vmatpush2.msra.mxu0 0.0
        %773 = vmatprep.subr.mxu0 0.0
        %774 = vmatpush2.msra.mxu0 0.0
        %775 = vmatprep.subr.mxu0 0.0
        %776 = vmatpush2.msra.mxu0 0.0
        %777 = vmatprep.subr.mxu0 0.0
        %778 = vmatpush2.msra.mxu0 0.0
        %779 = vmatprep.subr.mxu0 0.0
        %780 = vmatpush2.msra.mxu0 0.0
        %781 = vmatprep.subr.mxu0 0.0
        %782 = vmatpush2.msra.mxu0 0.0
        %783 = vmatprep.subr.mxu0 0.0
        %784 = vmatpush2.msra.mxu0 0.0
        %785 = vmatprep.subr.mxu0 0.0
        %786 = vmatpush2.msra.mxu0 0.0
        %787 = vmatprep.subr.mxu0 0.0
        %788 = vmatpush2.msra.mxu0 0.0
        %789 = vmatprep.subr.mxu0 0.0
        %790 = vmatpush2.msra.mxu0 0.0
        %791 = vmatprep.subr.mxu0 0.0
        %792 = vmatpush2.msra.mxu0 0.0
        %793 = vmatprep.subr.mxu0 0.0
        %794 = vmatpush2.msra.mxu0 0.0
        %795 = vmatprep.mubr.f32.mxu0 0.0
        %796 = vmatmul.mubr.f32.gmra.mxu0 %v707
        %v797 = vpop.f32.mrf.mxu0
        %v798 = vadd.f32 %v729, %v797
        %v799 = vpop.f32.mrf.mxu0
        %800 = vdwg.mxu0
        %801 = vst [vmem:[%s420] sm:$0xff] %v798
        %p802 = scmp.lt.s32.totalorder %s25, 1
        %s803 = scalar_select %p802, %s25, 1
        %s804 = smul.addr %s803, 8
        %s805 = scalar_lea.vmem %s9, %s804
        %p806 = scmp.lt.s32.totalorder %s25, 1
        %s807 = scalar_select %p806, %s25, 1
        %s808 = smul.addr %s807, 8
        %s809 = scalar_lea.vmem %s10, %s808
        // Predicated region
        $region73: #{mlp_ae_forward.1} parent=55 // pred_check
          %p810 = pneg %p237
        $region74: #{mlp_ae_forward.1} parent=55 // pred_check_branch
          %812 = sbr.rel (%p810) target = $region76
        $region75: #{mlp_ae_forward.1} parent=55 // pred_region
          _
        $region76: #{mlp_ae_forward.1} parent=55 // pred_fallthru
          _
        // Predicated region
        $region77: #{mlp_ae_forward.1} parent=55 // pred_check
          %p813 = pneg %p263
        $region78: #{mlp_ae_forward.1} parent=55 // pred_check_branch
          %815 = sbr.rel (%p813) target = $region80
        $region79: #{mlp_ae_forward.1} parent=55 // pred_region
          _
        $region80: #{mlp_ae_forward.1} parent=55 // pred_fallthru
          _
      $region56: #{mlp_ae_forward.1} parent=5 // pred_fallthru
        _
      %p816 = scmp.le.s32.totalorder 2, %s20
      // Predicated region
      $region81: #{mlp_ae_forward.1} parent=5 // pred_check
        %p817 = pneg %p816
      $region82: #{mlp_ae_forward.1} parent=5 // pred_check_branch
        %819 = sbr.rel (%p817) target = $region84
      $region83: #{mlp_ae_forward.1} parent=5 // pred_region
        %s820 = ssub.s32 %s20, 2
        // Predicated region
        $region85: #{mlp_ae_forward.1} parent=83 // pred_check
          %p821 = pneg %p243
        $region86: #{mlp_ae_forward.1} parent=83 // pred_check_branch
          %823 = sbr.rel (%p821) target = $region88
        $region87: #{mlp_ae_forward.1} parent=83 // pred_region
          %p824 = scmp.lt.s32.totalorder %s26, 1
          %s825 = scalar_select %p824, %s26, 1
          %s826 = smul.addr %s825, 8
          %s827 = scalar_lea.vmem %s9, %s826
        $region88: #{mlp_ae_forward.1} parent=83 // pred_fallthru
          _
        // Predicated region
        $region89: #{mlp_ae_forward.1} parent=83 // pred_check
          %p828 = pneg %p269
        $region90: #{mlp_ae_forward.1} parent=83 // pred_check_branch
          %830 = sbr.rel (%p828) target = $region92
        $region91: #{mlp_ae_forward.1} parent=83 // pred_region
          %p831 = scmp.lt.s32.totalorder %s26, 1
          %s832 = scalar_select %p831, %s26, 1
          %s833 = smul.addr %s832, 8
          %s834 = scalar_lea.vmem %s10, %s833
        $region92: #{mlp_ae_forward.1} parent=83 // pred_fallthru
          _
      $region84: #{mlp_ae_forward.1} parent=5 // pred_fallthru
        _
    $region6: #{mlp_ae_forward.1} parent=1 // loop_footer
      %s24 = sadd.s32 1, %s20
    $region7: #{mlp_ae_forward.1} parent=1 // loop_footer_branch
      %19 = sbr.rel target = $region3
    $region8: #{mlp_ae_forward.1} parent=1 // loop_exit
      _
    %835 = vsyncpa [#allocation3], 1
    %s836 = scalar_lea.sflag [#allocation3], 1
    %837 = vsyncpa %s836, 1
    %838 = vsyncpa [#allocation5], 1
    %839 = vsyncpa [#allocation8], 1

</llo_original>
